<compile_context>
chip_gen: v7x
topology: tpu7x:2x2x1
jax: 0.10.0
libtpu: 0.0.40
codegen_flags: <defaults>
</compile_context>

<pallas_src>
import math
import functools

import jax
import jax.numpy as jnp
from jax.experimental import pallas as pl
from jax.experimental.pallas import tpu as pltpu


# ----------------------------- kernels ---------------------------------------

def _kernel_bias(nf_ref, bias_ref, out_ref, *, activation):
    x = nf_ref[...] + bias_ref[...]          # bias (1, W) broadcasts over rows
    if activation is not None:
        x = activation(x)
    out_ref[...] = x.astype(out_ref.dtype)


def _kernel_nobias(nf_ref, out_ref, *, activation):
    x = nf_ref[...]
    if activation is not None:
        x = activation(x)
    out_ref[...] = x.astype(out_ref.dtype)


def _relu(x):
    return jnp.maximum(x, 0)


# ----------------------------- tiling heuristics ------------------------------

def _round_up(x, m):
    return ((x + m - 1) // m) * m


def _vmem_limit_bytes():
    """Generation-aware scoped-VMEM limit: ~75% of physical per-core VMEM
    (v5e/v6e: 128 MiB -> 96 MiB; v7x: 64 MiB -> 48 MiB). Falls back to 96 MiB."""
    cap = 128 << 20
    try:
        info = pltpu.get_tpu_info()
        cap = int(getattr(info, "vmem_capacity_bytes", cap)) or cap
    except Exception:
        pass
    return max(32 << 20, min(96 << 20, (cap * 3) // 4))


def _pick_tile_rows(rows, width, itemsize, vmem_limit):
    """Pick a row-tile (multiple of 8, or the full extent) sized by bytes:
    ~4 MiB blocks, double-buffered in+out (~4 live copies) under the VMEM
    budget, and >=4 grid steps for DMA/compute overlap when blocks stay big."""
    row_bytes = width * itemsize
    total_bytes = rows * row_bytes
    # Tiny arrays: single full-extent block (block_shape == array shape is legal).
    if rows <= 32 or total_bytes <= (1 << 20):
        return rows
    # Hard cap: ~4 live block copies (double-buffered in + out) plus headroom.
    max_block_bytes = max(8 * row_bytes, (vmem_limit - (4 << 20)) // 4)
    # Target ~4 MiB blocks (>=85% of HBM roofline; amortizes ~0.35us/step overhead).
    target_block_bytes = min(4 << 20, max_block_bytes)
    t = max(8, (target_block_bytes // row_bytes) // 8 * 8)
    # Keep >=4 grid steps (>=2 per v7x TensorCore) while blocks stay >= ~512 KiB.
    min_steps = 4
    if total_bytes >= min_steps * (512 << 10):
        t = min(t, _round_up(pl.cdiv(rows, min_steps), 8))
    return max(8, min(t, rows))


# ----------------------------- wrapper ----------------------------------------

def node_apply_module(nf, bias, nb_ef, *, activation=_relu, tile_rows=None):
    """Pallas implementation of NodeApplyModule.forward.

    nf:    [N, out_feats]   (kernel preserves dtype; pass bf16 to halve traffic)
    bias:  [out_feats] or None
    nb_ef: [N, ef_dim]      (pure passthrough — never enters the kernel)
    activation: callable or None (default: ReLU)

    For the in-place alias (input_output_aliases={0: 0}) to reuse the HBM
    buffer, donate nf at the jit boundary (jax.jit(..., donate_argnums=...)).
    Returns {'nf': ..., 'nb_ef': ...}.
    """
    N, F = nf.shape
    dtype = nf.dtype
    itemsize = jnp.dtype(dtype).itemsize
    use_bias = bias is not None

    # ---- lane-dense layout ---------------------------------------------------
    # Fold rows so the last dim becomes lcm(F, 128) (row-major reshape = free
    # layout plumbing).  If N doesn't divide the fold, pad the width up to a
    # multiple of 128 instead so stores are unmasked full-lane vst.
    fold = 128 // math.gcd(F, 128)
    if fold > 1 and N % fold == 0:
        rows, width, pad_w = N // fold, F * fold, 0
        x = nf.reshape(rows, width)
    else:
        fold = 1
        pad_w = (-F) % 128
        rows, width = N, F + pad_w
        x = nf if pad_w == 0 else jnp.pad(nf, ((0, 0), (0, pad_w)))

    vmem_limit = _vmem_limit_bytes()
    if tile_rows is None:
        tile_rows = _pick_tile_rows(rows, width, itemsize, vmem_limit)
    tile_rows = min(tile_rows, rows)
    grid = (pl.cdiv(rows, tile_rows),)

    x_spec = pl.BlockSpec((tile_rows, width), lambda i: (i, 0))
    out_spec = pl.BlockSpec((tile_rows, width), lambda i: (i, 0))

    if use_bias:
        bias_row = bias.astype(dtype).reshape(1, F)
        if fold > 1:
            bias_row = jnp.tile(bias_row, (1, fold))
        elif pad_w:
            bias_row = jnp.pad(bias_row, ((0, 0), (0, pad_w)))
        kernel = functools.partial(_kernel_bias, activation=activation)
        in_specs = [x_spec, pl.BlockSpec((1, width), lambda i: (0, 0))]
        operands = (x, bias_row)
    else:
        kernel = functools.partial(_kernel_nobias, activation=activation)
        in_specs = [x_spec]
        operands = (x,)

    y = pl.pallas_call(
        kernel,
        out_shape=jax.ShapeDtypeStruct((rows, width), dtype),
        grid_spec=pltpu.PrefetchScalarGridSpec(
            num_scalar_prefetch=0,
            grid=grid,
            in_specs=in_specs,
            out_specs=out_spec,
        ),
        input_output_aliases={0: 0},
        compiler_params=pltpu.CompilerParams(
            dimension_semantics=("parallel",),
            vmem_limit_bytes=vmem_limit,
        ),
    )(*operands)

    if fold > 1:
        nf_out = y.reshape(N, F)
    elif pad_w:
        nf_out = y[:, :F]
    else:
        nf_out = y
    # nb_ef passthrough: zero HBM traffic, just hand the input back.
    return {'nf': nf_out, 'nb_ef': nb_ef}


# ----------------------------- self-test --------------------------------------

if __name__ == "__main__":
    key = jax.random.PRNGKey(0)
    k_nf, k_ef, k_b, k_nf2, k_nf3, k_b3 = jax.random.split(key, 6)

    # --- primary check: module-scale shapes (N=8, F=32), fold=4 -> width 128 --
    N, OUT_FEATS, EF_DIM = 8, 32, 32
    nf = jax.random.normal(k_nf, (N, OUT_FEATS), dtype=jnp.float32)
    nb_ef = jax.random.normal(k_ef, (N, EF_DIM), dtype=jnp.float32)
    # bias init mirrors reset_parameters(): uniform(-stdv, stdv), stdv=1/sqrt(F)
    stdv = 1.0 / math.sqrt(OUT_FEATS)
    bias = jax.random.uniform(k_b, (OUT_FEATS,), dtype=jnp.float32,
                              minval=-stdv, maxval=stdv)

    out = node_apply_module(nf, bias, nb_ef)          # ReLU activation
    jax.block_until_ready(out)
    ref_nf = jnp.maximum(nf + bias[None, :], 0.0)
    assert jnp.allclose(out['nf'], ref_nf, atol=1e-6), "nf mismatch (bias+relu)"
    assert out['nb_ef'] is nb_ef or jnp.array_equal(out['nb_ef'], nb_ef), \
        "nb_ef passthrough mismatch"

    # --- secondary check: fold impossible (N=20 not divisible by fold=8) ------
    #     -> width padded 48 -> 128, no bias, no activation (identity copy)
    N2, F2 = 20, 48
    nf2 = jax.random.normal(k_nf2, (N2, F2), dtype=jnp.float32)
    nb_ef2 = jnp.zeros((N2, 8), dtype=jnp.float32)
    out2 = node_apply_module(nf2, None, nb_ef2, activation=None)
    jax.block_until_ready(out2)
    assert out2['nf'].shape == (N2, F2), "shape mismatch after pad/slice"
    assert jnp.allclose(out2['nf'], nf2, atol=1e-6), "nf mismatch (identity)"

    # --- tertiary check: bf16, F=128 (no fold/pad), multi-step tiled grid -----
    N3, F3 = 8192, 128
    nf3 = jax.random.normal(k_nf3, (N3, F3), dtype=jnp.float32).astype(jnp.bfloat16)
    bias3 = jax.random.uniform(k_b3, (F3,), dtype=jnp.float32,
                               minval=-0.1, maxval=0.1).astype(jnp.bfloat16)
    nb_ef3 = jnp.zeros((N3, 8), dtype=jnp.bfloat16)
    out3 = node_apply_module(nf3, bias3, nb_ef3)
    jax.block_until_ready(out3)
    ref3 = jnp.maximum(nf3 + bias3[None, :], 0)
    assert jnp.array_equal(out3['nf'], ref3), "nf mismatch (bf16 tiled)"

    print("KERNEL_OK")
</pallas_src>

<mosaic_0001>
module attributes {stable_mosaic.version = 11 : i64} {
  func.func @_kernel_bias(%arg0: i32, %arg1: memref<2x128xf32, #tpu.memory_space<vmem>>, %arg2: memref<1x128xf32, #tpu.memory_space<vmem>>, %arg3: memref<2x128xf32, #tpu.memory_space<vmem>>) attributes {dimension_semantics = [#tpu.dimension_semantics<parallel>], iteration_bounds = array<i64: 1>, scalar_prefetch = 0 : i64, scratch_operands = 0 : i64, tpu.core_type = #tpu.core_type<tc>, window_params = [{transform_indices = @transform_0, window_bounds = array<i64: 2, 128>}, {pipeline_mode = #tpu.pipeline_mode<synchronous>, transform_indices = @transform_1, window_bounds = array<i64: 1, 128>}, {transform_indices = @transform_2, window_bounds = array<i64: 2, 128>}]} {
    %c0 = arith.constant 0 : index
    %c0_0 = arith.constant 0 : index
    %0 = vector.load %arg1[%c0, %c0_0] : memref<2x128xf32, #tpu.memory_space<vmem>>, vector<2x128xf32>
    %c0_1 = arith.constant 0 : index
    %c0_2 = arith.constant 0 : index
    %1 = vector.load %arg2[%c0_1, %c0_2] : memref<1x128xf32, #tpu.memory_space<vmem>>, vector<1x128xf32>
    %2 = vector.broadcast %1 : vector<1x128xf32> to vector<2x128xf32>
    %3 = arith.addf %0, %2 : vector<2x128xf32>
    %cst = arith.constant 0.000000e+00 : f32
    %4 = vector.broadcast %cst : f32 to vector<2x128xf32>
    %5 = arith.maximumf %3, %4 : vector<2x128xf32>
    %c0_3 = arith.constant 0 : index
    %c0_4 = arith.constant 0 : index
    %6 = vector.load %arg3[%c0_3, %c0_4] : memref<2x128xf32, #tpu.memory_space<vmem>>, vector<2x128xf32>
    tpu.vector_store %arg3[%c0_3, %c0_4], %5 {strides = array<i32>} : memref<2x128xf32, #tpu.memory_space<vmem>>, vector<2x128xf32>,
    return
  }
  func.func @transform_0(%arg0: i32) -> (i32, i32) {
    %c0_i32 = arith.constant 0 : i32
    %c0_i32_0 = arith.constant 0 : i32
    return %arg0, %c0_i32 : i32, i32
  }
  func.func @transform_1(%arg0: i32) -> (i32, i32) {
    %c0_i32 = arith.constant 0 : i32
    %c0_i32_0 = arith.constant 0 : i32
    %c0_i32_1 = arith.constant 0 : i32
    return %c0_i32, %c0_i32_0 : i32, i32
  }
  func.func @transform_2(%arg0: i32) -> (i32, i32) {
    %c0_i32 = arith.constant 0 : i32
    %c0_i32_0 = arith.constant 0 : i32
    return %arg0, %c0_i32 : i32, i32
  }
}

</mosaic_0001>

<llo_original>
// kernel: tpu_custom_call.1
$region0: #{tpu_custom_call.1}
  #allocation0 [shape = 'u32[]', space=smem, size = 0x4, offset = 0x4, fixed_abs, tag = 'smem constant byte address 0x4 - core index']
  #allocation1 [shape = 'u32[144,128]{1,0:T(1,128)}', space=vmem, size = 0x12000, scoped, tag = 'internal scratch']
  %s0 = inlined_call_operand.hbm [shape: f32[2,128], index: 0, kind: input, shape index: {}, may-alias: {0,2}]
  %s1 = inlined_call_operand.hbm [shape: f32[1,128], index: 1, kind: input, shape index: {}]
  %s2 = inlined_call_operand.hbm [shape: f32[2,128], index: 2, kind: output, shape index: {}, may-alias: {0,2}]
  %s3 = sld [smem:[#allocation0]]
  $region26: #{tpu_custom_call.1} parent=0
    _
  %s5 = ssub.s32 1, %s3
  %s6 = scalar_select 0, %s5, %s3
  $region1: #{tpu_custom_call.1} parent=0
    #allocation2 [shape = 'u8[1024]{0}', space=vmem, size = 0x400, scoped, tag = 'input window, operand 0, single buffered']
    #allocation3 [shape = 's32[1]{0}', space=sflag, size = 0x4, scoped, tag = 'scoped memory for tpu_custom_call.1']
    #allocation4 [shape = 's32[1]{0}', space=sflag, size = 0x4, scoped, tag = 'scoped memory for tpu_custom_call.1']
    #allocation5 [shape = 'u8[512]{0}', space=vmem, size = 0x400, scoped, tag = 'input window, operand 1, single buffered']
    #allocation6 [shape = 's32[1]{0}', space=sflag, size = 0x4, scoped, tag = 'scoped memory for tpu_custom_call.1']
    #allocation7 [shape = 'u8[1024]{0}', space=vmem, size = 0x400, scoped, tag = 'output window, operand 0, single buffered']
    %7 = vsyncpa [#allocation3], 0
    %8 = vsyncpa [#allocation6], 0
    %9 = vsyncpa [#allocation4], 0
    // Predicated region
    $region2: #{tpu_custom_call.1} parent=1 // pred_check
      _
    $region3: #{tpu_custom_call.1} parent=1 // pred_check_branch
      %11 = sbr.rel (0) target = $region5
    $region4: #{tpu_custom_call.1} parent=1 // pred_region
      %s13 = ssub.s32 32, 32
      %14 = vsyncadd [#allocation3], %s13
      %s16 = sshll.u32 [#allocation2], 4
      %s17 = int_to_ptr.vmem [resolvable:$true] %s16
      %19 = dma.hbm_to_vmem [thread:$0]  %s0, 32, %s17, [#allocation3]
    $region5: #{tpu_custom_call.1} parent=1 // pred_fallthru
      _
    // Predicated region
    $region6: #{tpu_custom_call.1} parent=1 // pred_check
      _
    $region7: #{tpu_custom_call.1} parent=1 // pred_check_branch
      %21 = sbr.rel (0) target = $region9
    $region8: #{tpu_custom_call.1} parent=1 // pred_region
      %s23 = ssub.s32 16, 16
      %24 = vsyncadd [#allocation6], %s23
      %s26 = sshll.u32 [#allocation5], 4
      %s27 = int_to_ptr.vmem [resolvable:$true] %s26
      %29 = dma.hbm_to_vmem [thread:$0]  %s1, 16, %s27, [#allocation6]
    $region9: #{tpu_custom_call.1} parent=1 // pred_fallthru
      _
    // Predicated region
    $region10: #{tpu_custom_call.1} parent=1 // pred_check
      _
    $region11: #{tpu_custom_call.1} parent=1 // pred_check_branch
      %31 = sbr.rel (0) target = $region13
    $region12: #{tpu_custom_call.1} parent=1 // pred_region
      %32 = dma.done [#allocation3], 32
    $region13: #{tpu_custom_call.1} parent=1 // pred_fallthru
      _
    // Predicated region
    $region14: #{tpu_custom_call.1} parent=1 // pred_check
      _
    $region15: #{tpu_custom_call.1} parent=1 // pred_check_branch
      %34 = sbr.rel (0) target = $region17
    $region16: #{tpu_custom_call.1} parent=1 // pred_region
      %35 = dma.done [#allocation6], 16
    $region17: #{tpu_custom_call.1} parent=1 // pred_fallthru
      _
    %v36 = vld [vmem:[#allocation2] sm:$0x3]
    %v37 = vld [vmem:[#allocation5] sm:$0x1]
    %v39 = vlaneseq
    %v40 = vshrl.u32 %v39, 7
    %v41 = vsub.s32 0, %v40
    %v42 = vrot.slane %v37, %v41
    %v44 = vadd.f32 %v36, %v42
    %v45 = vmax.f32 %v44, 0.0
    %46 = vst [vmem:[#allocation7] sm:$0x3] %v45
    // Predicated region
    $region18: #{tpu_custom_call.1} parent=1 // pred_check
      _
    $region19: #{tpu_custom_call.1} parent=1 // pred_check_branch
      %48 = sbr.rel (0) target = $region21
    $region20: #{tpu_custom_call.1} parent=1 // pred_region
      %s50 = ssub.s32 32, 32
      %51 = vsyncadd [#allocation4], %s50
      %s53 = sshll.u32 [#allocation7], 4
      %s54 = int_to_ptr.vmem [resolvable:$true] %s53
      %56 = dma.vmem_to_hbm [thread:$0]  %s54, 32, %s2, [#allocation4]
    $region21: #{tpu_custom_call.1} parent=1 // pred_fallthru
      _
    // Predicated region
    $region22: #{tpu_custom_call.1} parent=1 // pred_check
      _
    $region23: #{tpu_custom_call.1} parent=1 // pred_check_branch
      %58 = sbr.rel (0) target = $region25
    $region24: #{tpu_custom_call.1} parent=1 // pred_region
      %59 = dma.done [#allocation4], 32
    $region25: #{tpu_custom_call.1} parent=1 // pred_fallthru
      _
    %60 = vsyncpa [#allocation3], 1
    %61 = vsyncpa [#allocation6], 1
    %62 = vsyncpa [#allocation4], 1

</llo_original>
